<compile_context>
chip_gen: v5e
topology: v5e:2x2
jax: 0.10.0
libtpu: 0.0.40
codegen_flags: <defaults>
</compile_context>

<pallas_src>
import jax
import jax.numpy as jnp
from jax.experimental import pallas as pl
from jax.experimental.pallas import tpu as pltpu

_SUBLANE = 8  # f32 vreg sublane count; batch tile must be a multiple of this


def _round_up(n, m):
    return ((n + m - 1) // m) * m


def _make_kernel(n_layers):
    """Build a kernel for n_layers Linear layers (>=1 hidden + 1 output).

    Ref order: inp, hint, w1a, w1b, b1, (w_i, b_i) for i=2..n_layers, out.
    Layer-1 is computed as inputs@W1a + hints@W1b + b1, i.e. the cat([inputs,
    hints]) of the PyTorch graph is expressed as a split matmul — no lane-axis
    concatenation inside the kernel.
    """

    def kernel(*refs):
        inp_ref, hint_ref, w1a_ref, w1b_ref, b1_ref = refs[:5]
        out_ref = refs[-1]
        rest = refs[5:-1]  # (w_i, b_i) pairs for layers 2..n_layers

        act_dtype = w1a_ref.dtype  # compute dtype fed to the MXU / EUP

        # Layer 1: Linear(cat([inputs, hints])) + Tanh  (split matmul).
        x = (jnp.dot(inp_ref[...], w1a_ref[...], preferred_element_type=jnp.float32)
             + jnp.dot(hint_ref[...], w1b_ref[...], preferred_element_type=jnp.float32)
             + b1_ref[...])
        x = jnp.tanh(x.astype(act_dtype))

        # Remaining hidden layers: Linear + Tanh.
        for li in range(n_layers - 2):
            w_ref, b_ref = rest[2 * li], rest[2 * li + 1]
            x = jnp.dot(x, w_ref[...], preferred_element_type=jnp.float32) + b_ref[...]
            x = jnp.tanh(x.astype(act_dtype))

        # Output layer: Linear + Sigmoid.
        w_ref, b_ref = rest[-2], rest[-1]
        logits = jnp.dot(x, w_ref[...], preferred_element_type=jnp.float32) + b_ref[...]
        out_ref[...] = jax.nn.sigmoid(logits).astype(out_ref.dtype)

    return kernel


def prepare_params(params, out_size, *, dtype=jnp.float32):
    """One-time parameter prep (call once, outside the per-step forward).

    params: dict with w{i} stored pre-transposed as (in_features, out_features)
    and b{i} as (1, out_features).  Splits W1 into the halves acting on
    `inputs` / `hints`, casts weights to the compute dtype (f32 default,
    bfloat16 for the fast path on v6e/v7x), keeps biases in f32.
    """
    n_layers = len(params) // 2
    # TODO(synk): the no-hidden-layer configuration (Linear+Sigmoid only) is
    # not supported by this kernel; GAIN always uses >=1 hidden layer.
    assert n_layers >= 2, "at least one hidden layer required"
    D = out_size
    w1, b1 = params["w1"], params["b1"]
    assert w1.shape[0] == 2 * D

    prepped = [
        w1[:D, :].astype(dtype),            # acts on `inputs`
        w1[D:, :].astype(dtype),            # acts on `hints`
        b1.reshape(1, -1).astype(jnp.float32),
    ]
    for i in range(2, n_layers + 1):
        prepped.append(params[f"w{i}"].astype(dtype))
        prepped.append(params[f"b{i}"].reshape(1, -1).astype(jnp.float32))
    return tuple(prepped)


def discriminator_forward(inputs, hints, prepped, *, block_b=1024):
    """inputs, hints: (B, out_size).  prepped: output of prepare_params()."""
    B, D = inputs.shape
    assert block_b % _SUBLANE == 0
    n_layers = (len(prepped) - 1) // 2
    compute_dtype = prepped[0].dtype

    # Balanced batch tiles; ensure >=2 grid steps (when B allows) so the
    # "parallel" grid axis actually occupies both v7x TensorCores.
    n_tiles = max(1, pl.cdiv(B, block_b))
    if n_tiles == 1 and B >= 2 * _SUBLANE:
        n_tiles = 2
    TB = _round_up(pl.cdiv(B, n_tiles), _SUBLANE)
    Bp = _round_up(B, TB)

    inp = inputs.astype(compute_dtype)   # no-op on the default f32 path
    hint = hints.astype(compute_dtype)
    if Bp != B:
        pad = ((0, Bp - B), (0, 0))      # rows only — no feature-axis inflation
        inp = jnp.pad(inp, pad)
        hint = jnp.pad(hint, pad)

    # Activations stream per batch tile at natural width D (last block dim ==
    # full array dim, so the (8,128) rule is satisfied without padding).
    act_spec = pl.BlockSpec((TB, D), lambda i: (i, 0))
    # Weights/biases: full-array blocks with constant index_map → VMEM-resident
    # across all grid steps (no re-DMA per tile).
    resident = lambda a: pl.BlockSpec(a.shape, lambda i: (0, 0))
    in_specs = [act_spec, act_spec] + [resident(a) for a in prepped]

    out_p = pl.pallas_call(
        _make_kernel(n_layers),
        out_shape=jax.ShapeDtypeStruct((Bp, D), jnp.float32),
        grid=(Bp // TB,),
        in_specs=in_specs,
        out_specs=pl.BlockSpec((TB, D), lambda i: (i, 0)),
        compiler_params=pltpu.CompilerParams(
            dimension_semantics=("parallel",),
        ),
    )(inp, hint, *prepped)

    return out_p if Bp == B else out_p[:B]


def init_params(key, out_size, hidden_sizes):
    """Deterministic synthetic parameters matching nn.Linear shapes
    (stored pre-transposed as (in, out))."""
    sizes = [out_size * 2] + list(hidden_sizes) + [out_size]
    params = {}
    for i in range(len(sizes) - 1):
        key, kw, kb = jax.random.split(key, 3)
        fan_in, fan_out = sizes[i], sizes[i + 1]
        bound = 1.0 / jnp.sqrt(fan_in)
        params[f"w{i+1}"] = jax.random.uniform(
            kw, (fan_in, fan_out), jnp.float32, -bound, bound)
        params[f"b{i+1}"] = jax.random.uniform(
            kb, (1, fan_out), jnp.float32, -bound, bound)
    return params


def reference_forward(inputs, hints, params):
    x = jnp.concatenate([inputs, hints], axis=1)
    n_layers = len(params) // 2
    for i in range(1, n_layers):
        x = jnp.tanh(x @ params[f"w{i}"] + params[f"b{i}"])
    return jax.nn.sigmoid(x @ params[f"w{n_layers}"] + params[f"b{n_layers}"])


if __name__ == "__main__":
    out_size = 16
    hidden_sizes = [32, 32]
    batch = 8

    key = jax.random.PRNGKey(0)
    key, k_in, k_hint = jax.random.split(key, 3)
    inputs = jax.random.normal(k_in, (batch, out_size), jnp.float32)
    hints = jax.random.bernoulli(k_hint, 0.5, (batch, out_size)).astype(jnp.float32)

    params = init_params(key, out_size, hidden_sizes)

    # One-time parameter prep (f32 parity path; pass dtype=jnp.bfloat16 for the
    # fast bf16 path on v6e/v7x — then loosen the tolerance accordingly).
    prepped = prepare_params(params, out_size)

    out = discriminator_forward(inputs, hints, prepped)
    out = jax.block_until_ready(out)

    ref = reference_forward(inputs, hints, params)
    assert out.shape == (batch, out_size)
    assert jnp.allclose(out, ref, atol=1e-5, rtol=1e-5), "mismatch vs reference"

    print("KERNEL_OK")
</pallas_src>

<mosaic_0001>
module attributes {stable_mosaic.version = 11 : i64} {
  func.func @kernel(%arg0: i32, %arg1: memref<8x16xf32, #tpu.memory_space<vmem>>, %arg2: memref<8x16xf32, #tpu.memory_space<vmem>>, %arg3: memref<16x32xf32, #tpu.memory_space<vmem>>, %arg4: memref<16x32xf32, #tpu.memory_space<vmem>>, %arg5: memref<1x32xf32, #tpu.memory_space<vmem>>, %arg6: memref<32x32xf32, #tpu.memory_space<vmem>>, %arg7: memref<1x32xf32, #tpu.memory_space<vmem>>, %arg8: memref<32x16xf32, #tpu.memory_space<vmem>>, %arg9: memref<1x16xf32, #tpu.memory_space<vmem>>, %arg10: memref<8x16xf32, #tpu.memory_space<vmem>>) attributes {dimension_semantics = [#tpu.dimension_semantics<parallel>], iteration_bounds = array<i64: 1>, scalar_prefetch = 0 : i64, scratch_operands = 0 : i64, tpu.core_type = #tpu.core_type<tc>, window_params = [{transform_indices = @transform_0, window_bounds = array<i64: 8, 16>}, {transform_indices = @transform_1, window_bounds = array<i64: 8, 16>}, {pipeline_mode = #tpu.pipeline_mode<synchronous>, transform_indices = @transform_2, window_bounds = array<i64: 16, 32>}, {pipeline_mode = #tpu.pipeline_mode<synchronous>, transform_indices = @transform_3, window_bounds = array<i64: 16, 32>}, {pipeline_mode = #tpu.pipeline_mode<synchronous>, transform_indices = @transform_4, window_bounds = array<i64: 1, 32>}, {pipeline_mode = #tpu.pipeline_mode<synchronous>, transform_indices = @transform_5, window_bounds = array<i64: 32, 32>}, {pipeline_mode = #tpu.pipeline_mode<synchronous>, transform_indices = @transform_6, window_bounds = array<i64: 1, 32>}, {pipeline_mode = #tpu.pipeline_mode<synchronous>, transform_indices = @transform_7, window_bounds = array<i64: 32, 16>}, {pipeline_mode = #tpu.pipeline_mode<synchronous>, transform_indices = @transform_8, window_bounds = array<i64: 1, 16>}, {transform_indices = @transform_9, window_bounds = array<i64: 8, 16>}]} {
    %c0 = arith.constant 0 : index
    %c0_0 = arith.constant 0 : index
    %0 = vector.load %arg1[%c0, %c0_0] : memref<8x16xf32, #tpu.memory_space<vmem>>, vector<8x16xf32>
    %c0_1 = arith.constant 0 : index
    %c0_2 = arith.constant 0 : index
    %1 = vector.load %arg3[%c0_1, %c0_2] : memref<16x32xf32, #tpu.memory_space<vmem>>, vector<16x32xf32>
    %cst = arith.constant dense<0.000000e+00> : vector<8x32xf32>
    %2 = tpu.matmul %0, %1, %cst {dimension_numbers = #tpu.dot_dimension_numbers<[1], [0], [0], [1], [0, 0, 1, 1], [], []>} : vector<8x16xf32>, vector<16x32xf32>, vector<8x32xf32> -> vector<8x32xf32>
    %c0_3 = arith.constant 0 : index
    %c0_4 = arith.constant 0 : index
    %3 = vector.load %arg2[%c0_3, %c0_4] : memref<8x16xf32, #tpu.memory_space<vmem>>, vector<8x16xf32>
    %c0_5 = arith.constant 0 : index
    %c0_6 = arith.constant 0 : index
    %4 = vector.load %arg4[%c0_5, %c0_6] : memref<16x32xf32, #tpu.memory_space<vmem>>, vector<16x32xf32>
    %cst_7 = arith.constant dense<0.000000e+00> : vector<8x32xf32>
    %5 = tpu.matmul %3, %4, %cst_7 {dimension_numbers = #tpu.dot_dimension_numbers<[1], [0], [0], [1], [0, 0, 1, 1], [], []>} : vector<8x16xf32>, vector<16x32xf32>, vector<8x32xf32> -> vector<8x32xf32>
    %6 = arith.addf %2, %5 : vector<8x32xf32>
    %c0_8 = arith.constant 0 : index
    %c0_9 = arith.constant 0 : index
    %7 = vector.load %arg5[%c0_8, %c0_9] : memref<1x32xf32, #tpu.memory_space<vmem>>, vector<1x32xf32>
    %8 = vector.broadcast %7 : vector<1x32xf32> to vector<8x32xf32>
    %9 = arith.addf %6, %8 : vector<8x32xf32>
    %10 = math.tanh %9 : vector<8x32xf32>
    %c0_10 = arith.constant 0 : index
    %c0_11 = arith.constant 0 : index
    %11 = vector.load %arg6[%c0_10, %c0_11] : memref<32x32xf32, #tpu.memory_space<vmem>>, vector<32x32xf32>
    %cst_12 = arith.constant dense<0.000000e+00> : vector<8x32xf32>
    %12 = tpu.matmul %10, %11, %cst_12 {dimension_numbers = #tpu.dot_dimension_numbers<[1], [0], [0], [1], [0, 0, 1, 1], [], []>} : vector<8x32xf32>, vector<32x32xf32>, vector<8x32xf32> -> vector<8x32xf32>
    %c0_13 = arith.constant 0 : index
    %c0_14 = arith.constant 0 : index
    %13 = vector.load %arg7[%c0_13, %c0_14] : memref<1x32xf32, #tpu.memory_space<vmem>>, vector<1x32xf32>
    %14 = vector.broadcast %13 : vector<1x32xf32> to vector<8x32xf32>
    %15 = arith.addf %12, %14 : vector<8x32xf32>
    %16 = math.tanh %15 : vector<8x32xf32>
    %c0_15 = arith.constant 0 : index
    %c0_16 = arith.constant 0 : index
    %17 = vector.load %arg8[%c0_15, %c0_16] : memref<32x16xf32, #tpu.memory_space<vmem>>, vector<32x16xf32>
    %cst_17 = arith.constant dense<0.000000e+00> : vector<8x16xf32>
    %18 = tpu.matmul %16, %17, %cst_17 {dimension_numbers = #tpu.dot_dimension_numbers<[1], [0], [0], [1], [0, 0, 1, 1], [], []>} : vector<8x32xf32>, vector<32x16xf32>, vector<8x16xf32> -> vector<8x16xf32>
    %c0_18 = arith.constant 0 : index
    %c0_19 = arith.constant 0 : index
    %19 = vector.load %arg9[%c0_18, %c0_19] : memref<1x16xf32, #tpu.memory_space<vmem>>, vector<1x16xf32>
    %20 = vector.broadcast %19 : vector<1x16xf32> to vector<8x16xf32>
    %21 = arith.addf %18, %20 : vector<8x16xf32>
    %22 = arith.negf %21 : vector<8x16xf32>
    %23 = math.exp %22 : vector<8x16xf32>
    %cst_20 = arith.constant 1.000000e+00 : f32
    %24 = vector.broadcast %cst_20 : f32 to vector<8x16xf32>
    %25 = arith.addf %24, %23 : vector<8x16xf32>
    %26 = arith.divf %24, %25 : vector<8x16xf32>
    %c0_21 = arith.constant 0 : index
    %c0_22 = arith.constant 0 : index
    %27 = vector.load %arg10[%c0_21, %c0_22] : memref<8x16xf32, #tpu.memory_space<vmem>>, vector<8x16xf32>
    tpu.vector_store %arg10[%c0_21, %c0_22], %26 {strides = array<i32>} : memref<8x16xf32, #tpu.memory_space<vmem>>, vector<8x16xf32>,
    return
  }
  func.func @transform_0(%arg0: i32) -> (i32, i32) {
    %c0_i32 = arith.constant 0 : i32
    %c0_i32_0 = arith.constant 0 : i32
    return %arg0, %c0_i32 : i32, i32
  }
  func.func @transform_1(%arg0: i32) -> (i32, i32) {
    %c0_i32 = arith.constant 0 : i32
    %c0_i32_0 = arith.constant 0 : i32
    return %arg0, %c0_i32 : i32, i32
  }
  func.func @transform_2(%arg0: i32) -> (i32, i32) {
    %c0_i32 = arith.constant 0 : i32
    %c0_i32_0 = arith.constant 0 : i32
    %c0_i32_1 = arith.constant 0 : i32
    return %c0_i32, %c0_i32_0 : i32, i32
  }
  func.func @transform_3(%arg0: i32) -> (i32, i32) {
    %c0_i32 = arith.constant 0 : i32
    %c0_i32_0 = arith.constant 0 : i32
    %c0_i32_1 = arith.constant 0 : i32
    return %c0_i32, %c0_i32_0 : i32, i32
  }
  func.func @transform_4(%arg0: i32) -> (i32, i32) {
    %c0_i32 = arith.constant 0 : i32
    %c0_i32_0 = arith.constant 0 : i32
    %c0_i32_1 = arith.constant 0 : i32
    return %c0_i32, %c0_i32_0 : i32, i32
  }
  func.func @transform_5(%arg0: i32) -> (i32, i32) {
    %c0_i32 = arith.constant 0 : i32
    %c0_i32_0 = arith.constant 0 : i32
    %c0_i32_1 = arith.constant 0 : i32
    return %c0_i32, %c0_i32_0 : i32, i32
  }
  func.func @transform_6(%arg0: i32) -> (i32, i32) {
    %c0_i32 = arith.constant 0 : i32
    %c0_i32_0 = arith.constant 0 : i32
    %c0_i32_1 = arith.constant 0 : i32
    return %c0_i32, %c0_i32_0 : i32, i32
  }
  func.func @transform_7(%arg0: i32) -> (i32, i32) {
    %c0_i32 = arith.constant 0 : i32
    %c0_i32_0 = arith.constant 0 : i32
    %c0_i32_1 = arith.constant 0 : i32
    return %c0_i32, %c0_i32_0 : i32, i32
  }
  func.func @transform_8(%arg0: i32) -> (i32, i32) {
    %c0_i32 = arith.constant 0 : i32
    %c0_i32_0 = arith.constant 0 : i32
    %c0_i32_1 = arith.constant 0 : i32
    return %c0_i32, %c0_i32_0 : i32, i32
  }
  func.func @transform_9(%arg0: i32) -> (i32, i32) {
    %c0_i32 = arith.constant 0 : i32
    %c0_i32_0 = arith.constant 0 : i32
    return %arg0, %c0_i32 : i32, i32
  }
}

</mosaic_0001>

<llo_original>
// kernel: tpu_custom_call.1
$region0: #{tpu_custom_call.1}
  #allocation0 [shape = 'u32[]', space=smem, size = 0x4, offset = 0x4, fixed_abs, tag = 'smem constant byte address 0x4 - core index']
  #allocation1 [shape = 'u32[72,128]{1,0:T(1,128)}', space=vmem, size = 0x9000, scoped, tag = 'internal scratch']
  %s0 = inlined_call_operand.hbm [shape: f32[8,16], index: 0, kind: input, shape index: {}]
  %s1 = inlined_call_operand.hbm [shape: f32[8,16], index: 1, kind: input, shape index: {}]
  %s2 = inlined_call_operand.vmem [shape: f32[16,32], index: 2, kind: input, shape index: {}]
  %s3 = inlined_call_operand.hbm [shape: f32[16,32], index: 3, kind: input, shape index: {}]
  %s4 = inlined_call_operand.vmem [shape: f32[1,32], index: 4, kind: input, shape index: {}]
  %s5 = inlined_call_operand.vmem [shape: f32[32,32], index: 5, kind: input, shape index: {}]
  %s6 = inlined_call_operand.vmem [shape: f32[1,32], index: 6, kind: input, shape index: {}]
  %s7 = inlined_call_operand.vmem [shape: f32[32,16], index: 7, kind: input, shape index: {}]
  %s8 = inlined_call_operand.vmem [shape: f32[1,16], index: 8, kind: input, shape index: {}]
  %s9 = inlined_call_operand.hbm [shape: f32[8,16], index: 9, kind: output, shape index: {}]
  %s10 = sld [smem:[#allocation0]]
  $region58: #{tpu_custom_call.1} parent=0
    _
  %s12 = ssub.s32 1, %s10
  %s13 = scalar_select 0, %s12, %s10
  $region1: #{tpu_custom_call.1} parent=0
    #allocation2 [shape = 'u8[4096]{0}', space=vmem, size = 0x1000, scoped, tag = 'input window, operand 0, single buffered']
    #allocation3 [shape = 's32[1]{0}', space=sflag, size = 0x4, scoped, tag = 'scoped memory for tpu_custom_call.1']
    #allocation4 [shape = 's32[1]{0}', space=sflag, size = 0x4, scoped, tag = 'scoped memory for tpu_custom_call.1']
    #allocation5 [shape = 'u8[4096]{0}', space=vmem, size = 0x1000, scoped, tag = 'input window, operand 1, single buffered']
    #allocation6 [shape = 's32[1]{0}', space=sflag, size = 0x4, scoped, tag = 'scoped memory for tpu_custom_call.1']
    #allocation7 [shape = 'u8[8192]{0}', space=vmem, size = 0x2000, scoped, tag = 'input window, operand 3, single buffered']
    #allocation8 [shape = 'u8[4096]{0}', space=vmem, size = 0x1000, scoped, tag = 'output window, operand 0, single buffered']
    %14 = vsyncpa [#allocation3], 0
    %15 = vsyncpa [#allocation6], 0
    %16 = vsyncpa [#allocation4], 0
    // Predicated region
    $region2: #{tpu_custom_call.1} parent=1 // pred_check
      _
    $region3: #{tpu_custom_call.1} parent=1 // pred_check_branch
      %18 = sbr.rel (0) target = $region5
    $region4: #{tpu_custom_call.1} parent=1 // pred_region
      %20 = vsyncadd [#allocation3], 0
      %s22 = sshll.u32 %s0, 4
      %s23 = int_to_ptr.hbm [resolvable:$true] %s22
      %s24 = sshll.u32 [#allocation2], 4
      %s25 = int_to_ptr.vmem [resolvable:$true] %s24
      %27 = dma.hbm_to_vmem [thread:$0]  %s23, 128, %s25, [#allocation3]
    $region5: #{tpu_custom_call.1} parent=1 // pred_fallthru
      _
    // Predicated region
    $region6: #{tpu_custom_call.1} parent=1 // pred_check
      _
    $region7: #{tpu_custom_call.1} parent=1 // pred_check_branch
      %29 = sbr.rel (0) target = $region9
    $region8: #{tpu_custom_call.1} parent=1 // pred_region
      %31 = vsyncadd [#allocation6], 0
      %s33 = sshll.u32 %s1, 4
      %s34 = int_to_ptr.hbm [resolvable:$true] %s33
      %s35 = sshll.u32 [#allocation5], 4
      %s36 = int_to_ptr.vmem [resolvable:$true] %s35
      %38 = dma.hbm_to_vmem [thread:$0]  %s34, 128, %s36, [#allocation6]
    $region9: #{tpu_custom_call.1} parent=1 // pred_fallthru
      _
    // Predicated region
    $region10: #{tpu_custom_call.1} parent=1 // pred_check
      _
    $region11: #{tpu_custom_call.1} parent=1 // pred_check_branch
      %40 = sbr.rel (0) target = $region13
    $region12: #{tpu_custom_call.1} parent=1 // pred_region
      _
    $region13: #{tpu_custom_call.1} parent=1 // pred_fallthru
      _
    // Predicated region
    $region14: #{tpu_custom_call.1} parent=1 // pred_check
      _
    $region15: #{tpu_custom_call.1} parent=1 // pred_check_branch
      %42 = sbr.rel (0) target = $region17
    $region16: #{tpu_custom_call.1} parent=1 // pred_region
      %44 = vsyncadd [#allocation6], 0
      %s45 = sshll.u32 %s3, 4
      %s46 = int_to_ptr.hbm [resolvable:$true] %s45
      %s47 = sshll.u32 [#allocation7], 4
      %s48 = int_to_ptr.vmem [resolvable:$true] %s47
      %53 = dma.hbm_to_vmem [thread:$0]  %s46, 256, %s48, [#allocation6], 128, 128, 8
    $region17: #{tpu_custom_call.1} parent=1 // pred_fallthru
      _
    // Predicated region
    $region18: #{tpu_custom_call.1} parent=1 // pred_check
      _
    $region19: #{tpu_custom_call.1} parent=1 // pred_check_branch
      %55 = sbr.rel (0) target = $region21
    $region20: #{tpu_custom_call.1} parent=1 // pred_region
      _
    $region21: #{tpu_custom_call.1} parent=1 // pred_fallthru
      _
    // Predicated region
    $region22: #{tpu_custom_call.1} parent=1 // pred_check
      _
    $region23: #{tpu_custom_call.1} parent=1 // pred_check_branch
      %57 = sbr.rel (0) target = $region25
    $region24: #{tpu_custom_call.1} parent=1 // pred_region
      _
    $region25: #{tpu_custom_call.1} parent=1 // pred_fallthru
      _
    // Predicated region
    $region26: #{tpu_custom_call.1} parent=1 // pred_check
      _
    $region27: #{tpu_custom_call.1} parent=1 // pred_check_branch
      %59 = sbr.rel (0) target = $region29
    $region28: #{tpu_custom_call.1} parent=1 // pred_region
      _
    $region29: #{tpu_custom_call.1} parent=1 // pred_fallthru
      _
    // Predicated region
    $region30: #{tpu_custom_call.1} parent=1 // pred_check
      _
    $region31: #{tpu_custom_call.1} parent=1 // pred_check_branch
      %61 = sbr.rel (0) target = $region33
    $region32: #{tpu_custom_call.1} parent=1 // pred_region
      _
    $region33: #{tpu_custom_call.1} parent=1 // pred_fallthru
      _
    // Predicated region
    $region34: #{tpu_custom_call.1} parent=1 // pred_check
      _
    $region35: #{tpu_custom_call.1} parent=1 // pred_check_branch
      %63 = sbr.rel (0) target = $region37
    $region36: #{tpu_custom_call.1} parent=1 // pred_region
      _
    $region37: #{tpu_custom_call.1} parent=1 // pred_fallthru
      _
    // Predicated region
    $region38: #{tpu_custom_call.1} parent=1 // pred_check
      _
    $region39: #{tpu_custom_call.1} parent=1 // pred_check_branch
      %65 = sbr.rel (0) target = $region41
    $region40: #{tpu_custom_call.1} parent=1 // pred_region
      %67 = dma.done [#allocation3], 128
    $region41: #{tpu_custom_call.1} parent=1 // pred_fallthru
      _
    // Predicated region
    $region42: #{tpu_custom_call.1} parent=1 // pred_check
      _
    $region43: #{tpu_custom_call.1} parent=1 // pred_check_branch
      %69 = sbr.rel (0) target = $region45
    $region44: #{tpu_custom_call.1} parent=1 // pred_region
      %71 = dma.done [#allocation6], 128
    $region45: #{tpu_custom_call.1} parent=1 // pred_fallthru
      _
    // Predicated region
    $region46: #{tpu_custom_call.1} parent=1 // pred_check
      _
    $region47: #{tpu_custom_call.1} parent=1 // pred_check_branch
      %73 = sbr.rel (0) target = $region49
    $region48: #{tpu_custom_call.1} parent=1 // pred_region
      %75 = dma.done [#allocation6], 256
    $region49: #{tpu_custom_call.1} parent=1 // pred_fallthru
      _
    %v76 = vld [vmem:[#allocation2] sm:$0xff]
    %v77 = vld [vmem:[%s2] sm:$0xff]
    %v78 = vld [vmem:[%s2 + $0x8] sm:$0xff]
    %v79 = vld [vmem:[#allocation5] sm:$0xff]
    %v80 = vld [vmem:[#allocation7] sm:$0xff]
    %v81 = vld [vmem:[#allocation7 + $0x8] sm:$0xff]
    %vm82 = vcmask 130048
    %v84 = vsel %vm82, %v79, 0
    %86 = vmatpush.msra.mxu0 0.0
    %87 = vmatpush.msra.mxu0 0.0
    %88 = vmatpush.msra.mxu0 0.0
    %89 = vmatpush.msra.mxu0 0.0
    %90 = vmatpush.msra.mxu0 0.0
    %91 = vmatpush.msra.mxu0 0.0
    %92 = vmatpush.msra.mxu0 0.0
    %93 = vmatpush.msra.mxu0 0.0
    %94 = vmatpush.msra.mxu0 0.0
    %95 = vmatpush.msra.mxu0 0.0
    %96 = vmatpush.msra.mxu0 0.0
    %97 = vmatpush.msra.mxu0 0.0
    %98 = vmatpush.msra.mxu0 0.0
    %99 = vmatpush.msra.mxu0 0.0
    %100 = vmatpush.msra.mxu0 %v81
    %101 = vmatpush.msra.mxu0 %v80
    %102 = vmatmul.f32.gmra.mxu0 %v84
    %v103 = vpop.f32.mrf.mxu0
    %v104 = vadd.f32 0.0, %v103
    %105 = vdwg.mxu0
    %v107 = vsel %vm82, %v76, 0
    %109 = vmatpush.msra.mxu0 0.0
    %110 = vmatpush.msra.mxu0 0.0
    %111 = vmatpush.msra.mxu0 0.0
    %112 = vmatpush.msra.mxu0 0.0
    %113 = vmatpush.msra.mxu0 0.0
    %114 = vmatpush.msra.mxu0 0.0
    %115 = vmatpush.msra.mxu0 0.0
    %116 = vmatpush.msra.mxu0 0.0
    %117 = vmatpush.msra.mxu0 0.0
    %118 = vmatpush.msra.mxu0 0.0
    %119 = vmatpush.msra.mxu0 0.0
    %120 = vmatpush.msra.mxu0 0.0
    %121 = vmatpush.msra.mxu0 0.0
    %122 = vmatpush.msra.mxu0 0.0
    %123 = vmatpush.msra.mxu0 %v78
    %124 = vmatpush.msra.mxu0 %v77
    %125 = vmatmul.f32.gmra.mxu0 %v107
    %v126 = vpop.f32.mrf.mxu0
    %v127 = vadd.f32 %v104, %v126
    %128 = vdwg.mxu0
    %v129 = vld [vmem:[%s4] sm:$0x1]
    %v131 = vperm.slane %v129, 0
    %v133 = vadd.f32 %v127, %v131
    %v134 = vtanh.pop %v133
    %v135 = vld [vmem:[%s5] sm:$0xff]
    %v136 = vld [vmem:[%s5 + $0x8] sm:$0xff]
    %v137 = vld [vmem:[%s5 + $0x10] sm:$0xff]
    %v138 = vld [vmem:[%s5 + $0x18] sm:$0xff]
    %v139 = vld [vmem:[%s6] sm:$0x1]
    %v141 = vperm.slane %v139, 0
    %vm143 = vcmask 261120
    %v145 = vsel %vm143, %v134, 0
    %147 = vmatpush.msra.mxu0 0.0
    %148 = vmatpush.msra.mxu0 0.0
    %149 = vmatpush.msra.mxu0 0.0
    %150 = vmatpush.msra.mxu0 0.0
    %151 = vmatpush.msra.mxu0 0.0
    %152 = vmatpush.msra.mxu0 0.0
    %153 = vmatpush.msra.mxu0 0.0
    %154 = vmatpush.msra.mxu0 0.0
    %155 = vmatpush.msra.mxu0 0.0
    %156 = vmatpush.msra.mxu0 0.0
    %157 = vmatpush.msra.mxu0 0.0
    %158 = vmatpush.msra.mxu0 0.0
    %159 = vmatpush.msra.mxu0 %v138
    %160 = vmatpush.msra.mxu0 %v137
    %161 = vmatpush.msra.mxu0 %v136
    %162 = vmatpush.msra.mxu0 %v135
    %163 = vmatmul.f32.gmra.mxu0 %v145
    %v164 = vpop.f32.mrf.mxu0
    %v165 = vadd.f32 %v141, %v164
    %166 = vdwg.mxu0
    %v167 = vtanh.pop %v165
    %v168 = vld [vmem:[%s7] sm:$0xff]
    %v169 = vld [vmem:[%s7 + $0x8] sm:$0xff]
    %v170 = vld [vmem:[%s7 + $0x10] sm:$0xff]
    %v171 = vld [vmem:[%s7 + $0x18] sm:$0xff]
    %v172 = vld [vmem:[%s8] sm:$0x1]
    %v174 = vperm.slane %v172, 0
    %v177 = vsel %vm143, %v167, 0
    %179 = vmatpush.msra.mxu0 0.0
    %180 = vmatpush.msra.mxu0 0.0
    %181 = vmatpush.msra.mxu0 0.0
    %182 = vmatpush.msra.mxu0 0.0
    %183 = vmatpush.msra.mxu0 0.0
    %184 = vmatpush.msra.mxu0 0.0
    %185 = vmatpush.msra.mxu0 0.0
    %186 = vmatpush.msra.mxu0 0.0
    %187 = vmatpush.msra.mxu0 0.0
    %188 = vmatpush.msra.mxu0 0.0
    %189 = vmatpush.msra.mxu0 0.0
    %190 = vmatpush.msra.mxu0 0.0
    %191 = vmatpush.msra.mxu0 %v171
    %192 = vmatpush.msra.mxu0 %v170
    %193 = vmatpush.msra.mxu0 %v169
    %194 = vmatpush.msra.mxu0 %v168
    %195 = vmatmul.f32.gmra.mxu0 %v177
    %v196 = vpop.f32.mrf.mxu0
    %v197 = vadd.f32 %v174, %v196
    %198 = vdwg.mxu0
    %v199 = vxor.u32 %v197, 2147483648
    %v200 = vmul.f32 %v199, 1.442695
    %v201 = vpow.pop %v200
    %v202 = vadd.f32 %v201, 1.0
    %v203 = vrcp.pop %v202
    %v204 = vmul.f32 %v202, %v203
    %v205 = vsub.f32 1.0, %v204
    %v206 = vmul.f32 %v203, %v205
    %v207 = vadd.f32 %v203, %v206
    %vm208 = vweird.f32 %v202
    %vm209 = vweird.f32 %v203
    %vm210 = vmor %vm208, %vm209
    %v211 = vsel %vm210, %v203, %v207
    %v212 = vand.u32 2147483647, %v202
    %vm213 = vcmp.eq.f32.partialorder %v212, 8.507059e+37
    %v214 = vand.u32 %v202, 2147483648
    %v215 = vor.u32 1.1754944e-38, %v214
    %v216 = vsel %vm213, %v215, %v211
    %v217 = vmul.f32 1.0, %v216
    %218 = vst.msk [vmem:[#allocation8] sm:$0xff] %vm82, %v217
    // Predicated region
    $region50: #{tpu_custom_call.1} parent=1 // pred_check
      _
    $region51: #{tpu_custom_call.1} parent=1 // pred_check_branch
      %220 = sbr.rel (0) target = $region53
    $region52: #{tpu_custom_call.1} parent=1 // pred_region
      %222 = vsyncadd [#allocation4], 0
      %s224 = sshll.u32 [#allocation8], 4
      %s225 = int_to_ptr.vmem [resolvable:$true] %s224
      %s226 = sshll.u32 %s9, 4
      %s227 = int_to_ptr.hbm [resolvable:$true] %s226
      %229 = dma.vmem_to_hbm [thread:$0]  %s225, 128, %s227, [#allocation4]
    $region53: #{tpu_custom_call.1} parent=1 // pred_fallthru
      _
    // Predicated region
    $region54: #{tpu_custom_call.1} parent=1 // pred_check
      _
    $region55: #{tpu_custom_call.1} parent=1 // pred_check_branch
      %231 = sbr.rel (0) target = $region57
    $region56: #{tpu_custom_call.1} parent=1 // pred_region
      %233 = dma.done [#allocation4], 128
    $region57: #{tpu_custom_call.1} parent=1 // pred_fallthru
      _
    %234 = vsyncpa [#allocation3], 1
    %235 = vsyncpa [#allocation6], 1
    %236 = vsyncpa [#allocation4], 1

</llo_original>
